<compile_context>
chip_gen: v6e
topology: v6e:2x2x1
jax: 0.10.0
libtpu: 0.0.40
codegen_flags: <defaults>
</compile_context>

<pallas_src>
import functools

import jax
import jax.numpy as jnp
from jax import lax
from jax.experimental import pallas as pl
from jax.experimental.pallas import tpu as pltpu

_EPS = 1e-10


def _round8_up(x):
    return -(-int(x) // 8) * 8


def _round8_down(x):
    return max(8, (int(x) // 8) * 8)


# ----------------------------------------------------------------------------- kernel A
def _pbar_aug_kernel(w_ref, pf_ref, key_ref, qry_ref, *, m, k, inv):
    """Ensemble mix + augmented KDE layouts (large row tile, few grid steps).

    key_ref : [p_bar, ||p_bar||^2, 1]                   (rows, K+2)  KDE key side
    qry_ref : [2*inv*p_bar, -inv, -inv*||p_bar||^2]     (rows, K+2)  KDE query side
    so that qry_i . key_j == -||p_i - p_j||^2 / (2 bw^2) straight off the MXU.
    """
    acc = w_ref[:, 0:1] * pf_ref[:, 0:k]
    for j in range(1, m):
        acc = acc + w_ref[:, j:j + 1] * pf_ref[:, j * k:(j + 1) * k]
    sq = jnp.sum(acc * acc, axis=1, keepdims=True)
    key_ref[...] = jnp.concatenate([acc, sq, jnp.ones_like(sq)], axis=1)
    qry_ref[...] = jnp.concatenate([(2.0 * inv) * acc,
                                    jnp.full_like(sq, -inv),
                                    (-inv) * sq], axis=1)


# ----------------------------------------------------------------------------- kernel B
def _kl_kde_kernel(counts_ref, valid_ref, key_ref, qry_ref, y_ref, out_ref, *,
                   inv, inv_n, lambda_bce, num_classes, block_rows, bf16_exp):
    """Per-row KL-KDE (+ optional NLL/BCE reg) contributions for one row block.

    counts_ref : (1, K)        f32  class-count histogram (hoisted, resident)
    valid_ref  : (N_pad, 1)    f32  1.0 for real rows, 0.0 for padding (resident)
    key_ref    : (N_pad, K+2)  f32  [p, ||p||^2, 1]                    (resident)
    qry_ref    : (TN, K+2)     f32  [2*inv*p, -inv, -inv*||p||^2]      (row block)
    y_ref      : (TN, 1)       i32  labels (padding holds -1)          (row block)
    out_ref    : (TN, 1)       f32  masked per-row contributions; wrapper sums / N.
    """
    k = num_classes
    tn = block_rows
    row0 = pl.multiple_of(pl.program_id(0) * tn, tn)

    # --- prediction-side KDE: one augmented MXU matmul yields -d * inv directly -------
    neg_sd = lax.dot_general(qry_ref[...], key_ref[...],
                             (((1,), (1,)), ((), ())),
                             preferred_element_type=jnp.float32)         # (TN, N_pad)
    neg_sd = jnp.minimum(neg_sd, 0.0)                                    # clamp d >= 0
    if bf16_exp:
        e = jnp.exp(neg_sd.astype(jnp.bfloat16)).astype(jnp.float32)
    else:
        e = jnp.exp(neg_sd)
    # lane reduction as an MXU mat-vec with the precomputed validity column
    f_pred = lax.dot_general(e, valid_ref[...],
                             (((1,), (0,)), ((), ())),
                             preferred_element_type=jnp.float32) * inv_n  # (TN, 1)

    # --- label-side KDE via class-count histogram (||onehot||^2 == 1) -----------------
    key_blk = key_ref[pl.ds(row0, tn), :]                                # (TN, K+2)
    p_blk = key_blk[:, 0:k]                                              # (TN, K)
    sq_blk = key_blk[:, k:k + 1]                                         # (TN, 1)
    neg_sd_lab = jnp.minimum(-inv * (sq_blk + 1.0 - 2.0 * p_blk), 0.0)   # (TN, K)
    f_label = jnp.sum(jnp.exp(neg_sd_lab) * counts_ref[...],
                      axis=1, keepdims=True) * inv_n                     # (TN, 1)

    # fused single log
    contrib = jnp.log((f_pred + _EPS) / (f_label + _EPS))                # (TN, 1)

    # --- optional regularizer (mean reduction applied in wrapper via /N) --------------
    if lambda_bce > 0.0:
        y_blk = y_ref[...]
        if k > 2:
            yoh = (y_blk ==
                   lax.broadcasted_iota(jnp.int32, (tn, k), 1)).astype(jnp.float32)
            reg = -jnp.sum(yoh * jnp.log(p_blk + _EPS), axis=1, keepdims=True)
        else:
            p1 = p_blk[:, 1:2]
            t = (y_blk == 1).astype(jnp.float32)
            logp = jnp.maximum(jnp.log(p1), -100.0)        # torch BCE log clamp
            log1mp = jnp.maximum(jnp.log(1.0 - p1), -100.0)
            reg = -(t * logp + (1.0 - t) * log1mp)
        contrib = contrib + lambda_bce * reg

    # mask padded query rows (hoisted validity column, not a per-step iota compare)
    out_ref[...] = contrib * valid_ref[pl.ds(row0, tn), :]


# ----------------------------------------------------------------------------- wrapper
def kl_loss_forward(p_preds, weights_l, y, *, bw, lambda_bce=0.0,
                    block_rows=256, bf16_exp=False):
    """KLLoss.forward: p_preds (N, M, K) f32, weights_l (N, M) f32, y (N,) int."""
    n, m, k = p_preds.shape
    inv = 1.0 / (2.0 * float(bw) * float(bw))

    # ---- row-tile sizing -------------------------------------------------------------
    n8 = _round8_up(n)
    # kernel B: ~3 live (TN, N_pad) f32 temporaries must fit a generation-safe budget;
    # also guarantee >= 2 row blocks (v7x megacore) and respect block_rows.
    kde_budget = 40 * 1024 * 1024
    cap_vmem = _round8_down(kde_budget // (3 * 4 * max(n8, 128)))
    cap_two = _round8_down(n8 // 2) if n8 >= 16 else 8
    tn = max(8, min(_round8_down(block_rows), cap_vmem, cap_two, n8))

    # kernel A: decoupled, much larger tile (multiple of tn so one padding serves both).
    lanes_a = m * k + m + 2 * (k + 2)
    rows_cap_a = max(tn, (24 * 1024 * 1024) // (4 * 2 * lanes_a))
    mult = max(1, min(rows_cap_a // tn, -(-n8 // tn)))
    tn_a = tn * mult
    n_pad = -(-n // tn_a) * tn_a
    nblk_a = n_pad // tn_a
    nblk_b = n_pad // tn

    # ---- host-side prep (pad rows; hoist grid-invariant tiny tensors) -----------------
    p_flat = p_preds.reshape(n, m * k).astype(jnp.float32)
    w = weights_l.astype(jnp.float32)
    y2d = y.astype(jnp.int32).reshape(n, 1)
    if n_pad > n:
        pad = n_pad - n
        p_flat = jnp.pad(p_flat, ((0, pad), (0, 0)))
        w = jnp.pad(w, ((0, pad), (0, 0)))
        y2d = jnp.pad(y2d, ((0, pad), (0, 0)), constant_values=-1)

    counts = jnp.sum(jax.nn.one_hot(y, k, dtype=jnp.float32), axis=0).reshape(1, k)
    valid = (jnp.arange(n_pad, dtype=jnp.int32) < n).astype(jnp.float32).reshape(n_pad, 1)

    # ---- kernel A: ensemble mix + augmented layouts ------------------------------------
    vmem_a = min(max(int(2 * 4 * lanes_a * tn_a * 1.5) + (4 << 20), 16 << 20), 100 << 20)
    key_aug, qry_aug = pl.pallas_call(
        functools.partial(_pbar_aug_kernel, m=m, k=k, inv=inv),
        out_shape=(jax.ShapeDtypeStruct((n_pad, k + 2), jnp.float32),
                   jax.ShapeDtypeStruct((n_pad, k + 2), jnp.float32)),
        grid=(nblk_a,),
        in_specs=[pl.BlockSpec((tn_a, m), lambda b: (b, 0)),
                  pl.BlockSpec((tn_a, m * k), lambda b: (b, 0))],
        out_specs=(pl.BlockSpec((tn_a, k + 2), lambda b: (b, 0)),
                   pl.BlockSpec((tn_a, k + 2), lambda b: (b, 0))),
        compiler_params=pltpu.CompilerParams(
            dimension_semantics=("parallel",), vmem_limit_bytes=vmem_a),
    )(w, p_flat)

    # ---- kernel B: row-tiled KDE-KL (+reg), keys resident ------------------------------
    est_b = (3 * tn * n_pad * 4                        # big (TN, N_pad) temporaries
             + 2 * (n_pad * (k + 2) + n_pad) * 4       # resident key_aug + valid (dbl-buf)
             + 2 * (tn * (k + 2) + 2 * tn + 1024) * 4)  # qry/y/out blocks + counts pad
    vmem_b = min(max(int(est_b * 1.5) + (8 << 20), 32 << 20), 100 << 20)
    per_row = pl.pallas_call(
        functools.partial(_kl_kde_kernel, inv=inv, inv_n=1.0 / float(n),
                          lambda_bce=float(lambda_bce), num_classes=k,
                          block_rows=tn, bf16_exp=bool(bf16_exp)),
        out_shape=jax.ShapeDtypeStruct((n_pad, 1), jnp.float32),
        grid=(nblk_b,),
        in_specs=[
            pl.BlockSpec((1, k), lambda b: (0, 0)),             # class counts  (resident)
            pl.BlockSpec((n_pad, 1), lambda b: (0, 0)),         # validity col  (resident)
            pl.BlockSpec((n_pad, k + 2), lambda b: (0, 0)),     # key aug       (resident)
            pl.BlockSpec((tn, k + 2), lambda b: (b, 0)),        # query aug     (row block)
            pl.BlockSpec((tn, 1), lambda b: (b, 0)),            # labels        (row block)
        ],
        out_specs=pl.BlockSpec((tn, 1), lambda b: (b, 0)),
        compiler_params=pltpu.CompilerParams(
            dimension_semantics=("parallel",), vmem_limit_bytes=vmem_b),
    )(counts, valid, key_aug, qry_aug, y2d)

    return jnp.sum(per_row) / n


# ----------------------------------------------------------------------------- reference
def _kl_loss_reference(p_preds, weights_l, y, *, bw, lambda_bce=0.0):
    """Pure-JAX reference (direct pairwise differences, no histogram/augmentation trick)."""
    n, m, k = p_preds.shape
    yoh = jax.nn.one_hot(y, k, dtype=jnp.float32)
    p_bar = jnp.einsum("nm,nmk->nk", weights_l.astype(jnp.float32),
                       p_preds.astype(jnp.float32))

    d_pp = jnp.sum((p_bar[:, None, :] - p_bar[None, :, :]) ** 2, axis=-1)
    d_py = jnp.sum((p_bar[:, None, :] - yoh[None, :, :]) ** 2, axis=-1)
    inv = 1.0 / (2.0 * bw * bw)
    f_pred = jnp.mean(jnp.exp(-d_pp * inv), axis=1)
    f_label = jnp.mean(jnp.exp(-d_py * inv), axis=1)
    loss_kl = jnp.mean(jnp.log(f_pred + _EPS) - jnp.log(f_label + _EPS))

    if lambda_bce > 0.0:
        if k > 2:
            reg = -jnp.mean(jnp.log(p_bar + _EPS)[jnp.arange(n), y])
        else:
            p1 = p_bar[:, 1]
            t = yoh[:, 1]
            reg = -jnp.mean(t * jnp.maximum(jnp.log(p1), -100.0)
                            + (1.0 - t) * jnp.maximum(jnp.log(1.0 - p1), -100.0))
        return loss_kl + lambda_bce * reg
    return loss_kl


if __name__ == "__main__":
    key = jax.random.PRNGKey(0)

    # --- test 1: K>2 (NLL reg branch) ------------------------------------------------
    N, M, K = 64, 4, 4
    k1, k2, k3 = jax.random.split(key, 3)
    p_preds = jax.nn.softmax(jax.random.normal(k1, (N, M, K)), axis=-1).astype(jnp.float32)
    weights_l = jax.nn.softmax(jax.random.normal(k2, (N, M)), axis=-1).astype(jnp.float32)
    y = jax.random.randint(k3, (N,), 0, K, dtype=jnp.int32)
    bw, lambda_bce = 0.2, 0.5

    loss1 = jax.block_until_ready(
        kl_loss_forward(p_preds, weights_l, y, bw=bw, lambda_bce=lambda_bce))
    ref1 = _kl_loss_reference(p_preds, weights_l, y, bw=bw, lambda_bce=lambda_bce)
    assert jnp.isfinite(loss1), loss1
    assert abs(float(loss1) - float(ref1)) < 1e-3, (float(loss1), float(ref1))

    # --- test 2: K==2 (BCE reg branch), multi-block grid with row padding ------------
    N2, M2, K2 = 72, 3, 2
    k4, k5, k6 = jax.random.split(jax.random.PRNGKey(1), 3)
    p_preds2 = jax.nn.softmax(jax.random.normal(k4, (N2, M2, K2)), axis=-1).astype(jnp.float32)
    weights2 = jax.nn.softmax(jax.random.normal(k5, (N2, M2)), axis=-1).astype(jnp.float32)
    y2 = jax.random.randint(k6, (N2,), 0, K2, dtype=jnp.int32)

    loss2 = jax.block_until_ready(
        kl_loss_forward(p_preds2, weights2, y2, bw=0.2, lambda_bce=0.25, block_rows=32))
    ref2 = _kl_loss_reference(p_preds2, weights2, y2, bw=0.2, lambda_bce=0.25)
    assert jnp.isfinite(loss2), loss2
    assert abs(float(loss2) - float(ref2)) < 1e-3, (float(loss2), float(ref2))

    print("KERNEL_OK")
</pallas_src>

<mosaic_0001>
module attributes {stable_mosaic.version = 11 : i64} {
  func.func @_pbar_aug_kernel(%arg0: i32, %arg1: memref<64x4xf32, #tpu.memory_space<vmem>>, %arg2: memref<64x16xf32, #tpu.memory_space<vmem>>, %arg3: memref<64x6xf32, #tpu.memory_space<vmem>>, %arg4: memref<64x6xf32, #tpu.memory_space<vmem>>) attributes {dimension_semantics = [#tpu.dimension_semantics<parallel>], iteration_bounds = array<i64: 1>, scalar_prefetch = 0 : i64, scratch_operands = 0 : i64, tpu.core_type = #tpu.core_type<tc>, window_params = [{transform_indices = @transform_0, window_bounds = array<i64: 64, 4>}, {transform_indices = @transform_1, window_bounds = array<i64: 64, 16>}, {transform_indices = @transform_2, window_bounds = array<i64: 64, 6>}, {transform_indices = @transform_3, window_bounds = array<i64: 64, 6>}]} {
    %c0 = arith.constant 0 : index
    %c0_0 = arith.constant 0 : index
    %0 = vector.load %arg1[%c0, %c0_0] : memref<64x4xf32, #tpu.memory_space<vmem>>, vector<64x1xf32>
    %c0_1 = arith.constant 0 : index
    %c0_2 = arith.constant 0 : index
    %1 = vector.load %arg2[%c0_1, %c0_2] : memref<64x16xf32, #tpu.memory_space<vmem>>, vector<64x4xf32>
    %2 = vector.broadcast %0 : vector<64x1xf32> to vector<64x4xf32>
    %3 = arith.mulf %2, %1 : vector<64x4xf32>
    %c0_3 = arith.constant 0 : index
    %c1 = arith.constant 1 : index
    %4 = vector.load %arg1[%c0_3, %c1] : memref<64x4xf32, #tpu.memory_space<vmem>>, vector<64x1xf32>
    %c0_4 = arith.constant 0 : index
    %c4 = arith.constant 4 : index
    %5 = vector.load %arg2[%c0_4, %c4] : memref<64x16xf32, #tpu.memory_space<vmem>>, vector<64x4xf32>
    %6 = vector.broadcast %4 : vector<64x1xf32> to vector<64x4xf32>
    %7 = arith.mulf %6, %5 : vector<64x4xf32>
    %8 = arith.addf %3, %7 : vector<64x4xf32>
    %c0_5 = arith.constant 0 : index
    %c2 = arith.constant 2 : index
    %9 = vector.load %arg1[%c0_5, %c2] : memref<64x4xf32, #tpu.memory_space<vmem>>, vector<64x1xf32>
    %c0_6 = arith.constant 0 : index
    %c8 = arith.constant 8 : index
    %10 = vector.load %arg2[%c0_6, %c8] : memref<64x16xf32, #tpu.memory_space<vmem>>, vector<64x4xf32>
    %11 = vector.broadcast %9 : vector<64x1xf32> to vector<64x4xf32>
    %12 = arith.mulf %11, %10 : vector<64x4xf32>
    %13 = arith.addf %8, %12 : vector<64x4xf32>
    %c0_7 = arith.constant 0 : index
    %c3 = arith.constant 3 : index
    %14 = vector.load %arg1[%c0_7, %c3] : memref<64x4xf32, #tpu.memory_space<vmem>>, vector<64x1xf32>
    %c0_8 = arith.constant 0 : index
    %c12 = arith.constant 12 : index
    %15 = vector.load %arg2[%c0_8, %c12] : memref<64x16xf32, #tpu.memory_space<vmem>>, vector<64x4xf32>
    %16 = vector.broadcast %14 : vector<64x1xf32> to vector<64x4xf32>
    %17 = arith.mulf %16, %15 : vector<64x4xf32>
    %18 = arith.addf %13, %17 : vector<64x4xf32>
    %19 = arith.mulf %18, %18 : vector<64x4xf32>
    %cst = arith.constant dense<0.000000e+00> : vector<64xf32>
    %20 = vector.multi_reduction <add>, %19, %cst [1] : vector<64x4xf32> to vector<64xf32>
    %21 = vector.shape_cast %20 : vector<64xf32> to vector<64x1xf32>
    %cst_9 = arith.constant 1.000000e+00 : f32
    %22 = vector.broadcast %cst_9 : f32 to vector<64x1xf32>
    %23 = tpu.concatenate %18, %21, %22 in 1 : vector<64x4xf32>, vector<64x1xf32>, vector<64x1xf32> -> vector<64x6xf32>
    %c0_10 = arith.constant 0 : index
    %c0_11 = arith.constant 0 : index
    %24 = vector.load %arg3[%c0_10, %c0_11] : memref<64x6xf32, #tpu.memory_space<vmem>>, vector<64x6xf32>
    tpu.vector_store %arg3[%c0_10, %c0_11], %23 {strides = array<i32>} : memref<64x6xf32, #tpu.memory_space<vmem>>, vector<64x6xf32>,
    %cst_12 = arith.constant 2.500000e+01 : f32
    %25 = vector.broadcast %cst_12 : f32 to vector<64x4xf32>
    %26 = arith.mulf %25, %18 : vector<64x4xf32>
    %cst_13 = arith.constant -1.250000e+01 : f32
    %27 = vector.broadcast %cst_13 : f32 to vector<64x1xf32>
    %cst_14 = arith.constant -1.250000e+01 : f32
    %28 = vector.broadcast %cst_14 : f32 to vector<64x1xf32>
    %29 = arith.mulf %28, %21 : vector<64x1xf32>
    %30 = tpu.concatenate %26, %27, %29 in 1 : vector<64x4xf32>, vector<64x1xf32>, vector<64x1xf32> -> vector<64x6xf32>
    %c0_15 = arith.constant 0 : index
    %c0_16 = arith.constant 0 : index
    %31 = vector.load %arg4[%c0_15, %c0_16] : memref<64x6xf32, #tpu.memory_space<vmem>>, vector<64x6xf32>
    tpu.vector_store %arg4[%c0_15, %c0_16], %30 {strides = array<i32>} : memref<64x6xf32, #tpu.memory_space<vmem>>, vector<64x6xf32>,
    return
  }
  func.func @transform_0(%arg0: i32) -> (i32, i32) {
    %c0_i32 = arith.constant 0 : i32
    %c0_i32_0 = arith.constant 0 : i32
    return %arg0, %c0_i32 : i32, i32
  }
  func.func @transform_1(%arg0: i32) -> (i32, i32) {
    %c0_i32 = arith.constant 0 : i32
    %c0_i32_0 = arith.constant 0 : i32
    return %arg0, %c0_i32 : i32, i32
  }
  func.func @transform_2(%arg0: i32) -> (i32, i32) {
    %c0_i32 = arith.constant 0 : i32
    %c0_i32_0 = arith.constant 0 : i32
    return %arg0, %c0_i32 : i32, i32
  }
  func.func @transform_3(%arg0: i32) -> (i32, i32) {
    %c0_i32 = arith.constant 0 : i32
    %c0_i32_0 = arith.constant 0 : i32
    return %arg0, %c0_i32 : i32, i32
  }
}

</mosaic_0001>

<llo_original>
// kernel: tpu_custom_call.1
$region0: #{tpu_custom_call.1}
  #allocation0 [shape = 'u32[]', space=smem, size = 0x4, offset = 0x4, fixed_abs, tag = 'smem constant byte address 0x4 - core index']
  #allocation1 [shape = 'u32[144,128]{1,0:T(1,128)}', space=vmem, size = 0x12000, scoped, tag = 'internal scratch']
  %s0 = inlined_call_operand.vmem [shape: f32[64,4], index: 0, kind: input, shape index: {}]
  %s1 = inlined_call_operand.vmem [shape: f32[64,16], index: 1, kind: input, shape index: {}]
  %s2 = inlined_call_operand.vmem [shape: f32[64,6], index: 2, kind: output, shape index: {0}]
  %s3 = inlined_call_operand.vmem [shape: f32[64,6], index: 3, kind: output, shape index: {1}]
  %4 = xla_tuple %s2, %s3
  %s5 = sld [smem:[#allocation0]]
  $region26: #{tpu_custom_call.1} parent=0
    _
  %s7 = ssub.s32 1, %s5
  %s8 = scalar_select 0, %s7, %s5
  // Predicated region
  $region2: #{tpu_custom_call.1} parent=0 // pred_check
    _
  $region3: #{tpu_custom_call.1} parent=0 // pred_check_branch
    %10 = sbr.rel (0) target = $region5
  $region4: #{tpu_custom_call.1} parent=0 // pred_region
    _
  $region5: #{tpu_custom_call.1} parent=0 // pred_fallthru
    _
  // Predicated region
  $region6: #{tpu_custom_call.1} parent=0 // pred_check
    _
  $region7: #{tpu_custom_call.1} parent=0 // pred_check_branch
    %12 = sbr.rel (0) target = $region9
  $region8: #{tpu_custom_call.1} parent=0 // pred_region
    _
  $region9: #{tpu_custom_call.1} parent=0 // pred_fallthru
    _
  %v13 = vld [vmem:[%s0] sm:$0xff]
  %v14 = vld [vmem:[%s0 + $0x8] sm:$0xff]
  %v15 = vld [vmem:[%s0 + $0x10] sm:$0xff]
  %v16 = vld [vmem:[%s0 + $0x18] sm:$0xff]
  %v17 = vld [vmem:[%s0 + $0x20] sm:$0xff]
  %v18 = vld [vmem:[%s0 + $0x28] sm:$0xff]
  %v19 = vld [vmem:[%s0 + $0x30] sm:$0xff]
  %v20 = vld [vmem:[%s0 + $0x38] sm:$0xff]
  %v21 = vld [vmem:[%s1] sm:$0xff]
  %v22 = vld [vmem:[%s1 + $0x8] sm:$0xff]
  %v23 = vld [vmem:[%s1 + $0x10] sm:$0xff]
  %v24 = vld [vmem:[%s1 + $0x18] sm:$0xff]
  %v25 = vld [vmem:[%s1 + $0x20] sm:$0xff]
  %v26 = vld [vmem:[%s1 + $0x28] sm:$0xff]
  %v27 = vld [vmem:[%s1 + $0x30] sm:$0xff]
  %v28 = vld [vmem:[%s1 + $0x38] sm:$0xff]
  %30 = vset.pattern.permute.xlu0 0
  %31 = vperm.xlu0 %30, %v13
  %v32 = vpop.permute.xlu0 %31
  %35 = vset.pattern.permute.xlu0 0
  %36 = vperm.xlu0 %35, %v14
  %v37 = vpop.permute.xlu0 %36
  %40 = vset.pattern.permute.xlu0 0
  %41 = vperm.xlu0 %40, %v15
  %v42 = vpop.permute.xlu0 %41
  %45 = vset.pattern.permute.xlu0 0
  %46 = vperm.xlu0 %45, %v16
  %v47 = vpop.permute.xlu0 %46
  %50 = vset.pattern.permute.xlu0 0
  %51 = vperm.xlu0 %50, %v17
  %v52 = vpop.permute.xlu0 %51
  %55 = vset.pattern.permute.xlu0 0
  %56 = vperm.xlu0 %55, %v18
  %v57 = vpop.permute.xlu0 %56
  %60 = vset.pattern.permute.xlu0 0
  %61 = vperm.xlu0 %60, %v19
  %v62 = vpop.permute.xlu0 %61
  %65 = vset.pattern.permute.xlu0 0
  %66 = vperm.xlu0 %65, %v20
  %v67 = vpop.permute.xlu0 %66
  %v69 = vmul.f32 %v32, %v21
  %v70 = vmul.f32 %v37, %v22
  %v71 = vmul.f32 %v42, %v23
  %v72 = vmul.f32 %v47, %v24
  %v73 = vmul.f32 %v52, %v25
  %v74 = vmul.f32 %v57, %v26
  %v75 = vmul.f32 %v62, %v27
  %v76 = vmul.f32 %v67, %v28
  %77 = vset.pattern.permute.xlu0 1
  %78 = vperm.xlu0 %77, %v13
  %v79 = vpop.permute.xlu0 %78
  %81 = vset.pattern.permute.xlu0 1
  %82 = vperm.xlu0 %81, %v14
  %v83 = vpop.permute.xlu0 %82
  %85 = vset.pattern.permute.xlu0 1
  %86 = vperm.xlu0 %85, %v15
  %v87 = vpop.permute.xlu0 %86
  %89 = vset.pattern.permute.xlu0 1
  %90 = vperm.xlu0 %89, %v16
  %v91 = vpop.permute.xlu0 %90
  %93 = vset.pattern.permute.xlu0 1
  %94 = vperm.xlu0 %93, %v17
  %v95 = vpop.permute.xlu0 %94
  %97 = vset.pattern.permute.xlu0 1
  %98 = vperm.xlu0 %97, %v18
  %v99 = vpop.permute.xlu0 %98
  %101 = vset.pattern.permute.xlu0 1
  %102 = vperm.xlu0 %101, %v19
  %v103 = vpop.permute.xlu0 %102
  %105 = vset.pattern.permute.xlu0 1
  %106 = vperm.xlu0 %105, %v20
  %v107 = vpop.permute.xlu0 %106
  %v109 = vmul.f32 %v79, %v21
  %v110 = vmul.f32 %v83, %v22
  %v111 = vmul.f32 %v87, %v23
  %v112 = vmul.f32 %v91, %v24
  %v113 = vmul.f32 %v95, %v25
  %v114 = vmul.f32 %v99, %v26
  %v115 = vmul.f32 %v103, %v27
  %v116 = vmul.f32 %v107, %v28
  %125 = vrot.lane.b32.xlu0 %v109, 124
  %v126 = vpop.permute.xlu0 %125
  %127 = vrot.lane.b32.xlu0 %v110, 124
  %v128 = vpop.permute.xlu0 %127
  %129 = vrot.lane.b32.xlu0 %v111, 124
  %v130 = vpop.permute.xlu0 %129
  %131 = vrot.lane.b32.xlu0 %v112, 124
  %v132 = vpop.permute.xlu0 %131
  %133 = vrot.lane.b32.xlu0 %v113, 124
  %v134 = vpop.permute.xlu0 %133
  %135 = vrot.lane.b32.xlu0 %v114, 124
  %v136 = vpop.permute.xlu0 %135
  %137 = vrot.lane.b32.xlu0 %v115, 124
  %v138 = vpop.permute.xlu0 %137
  %139 = vrot.lane.b32.xlu0 %v116, 124
  %v140 = vpop.permute.xlu0 %139
  %v149 = vadd.f32 %v69, %v126
  %v150 = vadd.f32 %v70, %v128
  %v151 = vadd.f32 %v71, %v130
  %v152 = vadd.f32 %v72, %v132
  %v153 = vadd.f32 %v73, %v134
  %v154 = vadd.f32 %v74, %v136
  %v155 = vadd.f32 %v75, %v138
  %v156 = vadd.f32 %v76, %v140
  %157 = vset.pattern.permute.xlu0 2
  %158 = vperm.xlu0 %157, %v13
  %v159 = vpop.permute.xlu0 %158
  %161 = vset.pattern.permute.xlu0 2
  %162 = vperm.xlu0 %161, %v14
  %v163 = vpop.permute.xlu0 %162
  %165 = vset.pattern.permute.xlu0 2
  %166 = vperm.xlu0 %165, %v15
  %v167 = vpop.permute.xlu0 %166
  %169 = vset.pattern.permute.xlu0 2
  %170 = vperm.xlu0 %169, %v16
  %v171 = vpop.permute.xlu0 %170
  %173 = vset.pattern.permute.xlu0 2
  %174 = vperm.xlu0 %173, %v17
  %v175 = vpop.permute.xlu0 %174
  %177 = vset.pattern.permute.xlu0 2
  %178 = vperm.xlu0 %177, %v18
  %v179 = vpop.permute.xlu0 %178
  %181 = vset.pattern.permute.xlu0 2
  %182 = vperm.xlu0 %181, %v19
  %v183 = vpop.permute.xlu0 %182
  %185 = vset.pattern.permute.xlu0 2
  %186 = vperm.xlu0 %185, %v20
  %v187 = vpop.permute.xlu0 %186
  %v189 = vmul.f32 %v159, %v21
  %v190 = vmul.f32 %v163, %v22
  %v191 = vmul.f32 %v167, %v23
  %v192 = vmul.f32 %v171, %v24
  %v193 = vmul.f32 %v175, %v25
  %v194 = vmul.f32 %v179, %v26
  %v195 = vmul.f32 %v183, %v27
  %v196 = vmul.f32 %v187, %v28
  %205 = vrot.lane.b32.xlu0 %v189, 120
  %v206 = vpop.permute.xlu0 %205
  %207 = vrot.lane.b32.xlu0 %v190, 120
  %v208 = vpop.permute.xlu0 %207
  %209 = vrot.lane.b32.xlu0 %v191, 120
  %v210 = vpop.permute.xlu0 %209
  %211 = vrot.lane.b32.xlu0 %v192, 120
  %v212 = vpop.permute.xlu0 %211
  %213 = vrot.lane.b32.xlu0 %v193, 120
  %v214 = vpop.permute.xlu0 %213
  %215 = vrot.lane.b32.xlu0 %v194, 120
  %v216 = vpop.permute.xlu0 %215
  %217 = vrot.lane.b32.xlu0 %v195, 120
  %v218 = vpop.permute.xlu0 %217
  %219 = vrot.lane.b32.xlu0 %v196, 120
  %v220 = vpop.permute.xlu0 %219
  %v229 = vadd.f32 %v149, %v206
  %v230 = vadd.f32 %v150, %v208
  %v231 = vadd.f32 %v151, %v210
  %v232 = vadd.f32 %v152, %v212
  %v233 = vadd.f32 %v153, %v214
  %v234 = vadd.f32 %v154, %v216
  %v235 = vadd.f32 %v155, %v218
  %v236 = vadd.f32 %v156, %v220
  %237 = vset.pattern.permute.xlu0 3
  %238 = vperm.xlu0 %237, %v13
  %v239 = vpop.permute.xlu0 %238
  %241 = vset.pattern.permute.xlu0 3
  %242 = vperm.xlu0 %241, %v14
  %v243 = vpop.permute.xlu0 %242
  %245 = vset.pattern.permute.xlu0 3
  %246 = vperm.xlu0 %245, %v15
  %v247 = vpop.permute.xlu0 %246
  %249 = vset.pattern.permute.xlu0 3
  %250 = vperm.xlu0 %249, %v16
  %v251 = vpop.permute.xlu0 %250
  %253 = vset.pattern.permute.xlu0 3
  %254 = vperm.xlu0 %253, %v17
  %v255 = vpop.permute.xlu0 %254
  %257 = vset.pattern.permute.xlu0 3
  %258 = vperm.xlu0 %257, %v18
  %v259 = vpop.permute.xlu0 %258
  %261 = vset.pattern.permute.xlu0 3
  %262 = vperm.xlu0 %261, %v19
  %v263 = vpop.permute.xlu0 %262
  %265 = vset.pattern.permute.xlu0 3
  %266 = vperm.xlu0 %265, %v20
  %v267 = vpop.permute.xlu0 %266
  %v269 = vmul.f32 %v239, %v21
  %v270 = vmul.f32 %v243, %v22
  %v271 = vmul.f32 %v247, %v23
  %v272 = vmul.f32 %v251, %v24
  %v273 = vmul.f32 %v255, %v25
  %v274 = vmul.f32 %v259, %v26
  %v275 = vmul.f32 %v263, %v27
  %v276 = vmul.f32 %v267, %v28
  %285 = vrot.lane.b32.xlu0 %v269, 116
  %v286 = vpop.permute.xlu0 %285
  %287 = vrot.lane.b32.xlu0 %v270, 116
  %v288 = vpop.permute.xlu0 %287
  %289 = vrot.lane.b32.xlu0 %v271, 116
  %v290 = vpop.permute.xlu0 %289
  %291 = vrot.lane.b32.xlu0 %v272, 116
  %v292 = vpop.permute.xlu0 %291
  %293 = vrot.lane.b32.xlu0 %v273, 116
  %v294 = vpop.permute.xlu0 %293
  %295 = vrot.lane.b32.xlu0 %v274, 116
  %v296 = vpop.permute.xlu0 %295
  %297 = vrot.lane.b32.xlu0 %v275, 116
  %v298 = vpop.permute.xlu0 %297
  %299 = vrot.lane.b32.xlu0 %v276, 116
  %v300 = vpop.permute.xlu0 %299
  %v309 = vadd.f32 %v229, %v286
  %v310 = vadd.f32 %v230, %v288
  %v311 = vadd.f32 %v231, %v290
  %v312 = vadd.f32 %v232, %v292
  %v313 = vadd.f32 %v233, %v294
  %v314 = vadd.f32 %v234, %v296
  %v315 = vadd.f32 %v235, %v298
  %v316 = vadd.f32 %v236, %v300
  %v317 = vmul.f32 %v309, %v309
  %v318 = vmul.f32 %v310, %v310
  %v319 = vmul.f32 %v311, %v311
  %v320 = vmul.f32 %v312, %v312
  %v321 = vmul.f32 %v313, %v313
  %v322 = vmul.f32 %v314, %v314
  %v323 = vmul.f32 %v315, %v315
  %v324 = vmul.f32 %v316, %v316
  %vm325 = vcmask 31744
  %v326 = vsel %vm325, %v317, 0.0
  %327 = vadd.xlane.f32.xlu0 %v326
  %v328 = vpop.xlane.xlu0 %327
  %v329 = vsel %vm325, %v318, 0.0
  %330 = vadd.xlane.f32.xlu0 %v329
  %v331 = vpop.xlane.xlu0 %330
  %v332 = vsel %vm325, %v319, 0.0
  %333 = vadd.xlane.f32.xlu0 %v332
  %v334 = vpop.xlane.xlu0 %333
  %v335 = vsel %vm325, %v320, 0.0
  %336 = vadd.xlane.f32.xlu0 %v335
  %v337 = vpop.xlane.xlu0 %336
  %v338 = vsel %vm325, %v321, 0.0
  %339 = vadd.xlane.f32.xlu0 %v338
  %v340 = vpop.xlane.xlu0 %339
  %v341 = vsel %vm325, %v322, 0.0
  %342 = vadd.xlane.f32.xlu0 %v341
  %v343 = vpop.xlane.xlu0 %342
  %v344 = vsel %vm325, %v323, 0.0
  %345 = vadd.xlane.f32.xlu0 %v344
  %v346 = vpop.xlane.xlu0 %345
  %v347 = vsel %vm325, %v324, 0.0
  %348 = vadd.xlane.f32.xlu0 %v347
  %v349 = vpop.xlane.xlu0 %348
  %v350 = vsel %vm325, %v309, %v328
  %v351 = vsel %vm325, %v310, %v331
  %v352 = vsel %vm325, %v311, %v334
  %v353 = vsel %vm325, %v312, %v337
  %v354 = vsel %vm325, %v313, %v340
  %v355 = vsel %vm325, %v314, %v343
  %v356 = vsel %vm325, %v315, %v346
  %v357 = vsel %vm325, %v316, %v349
  %vm358 = vcmask 39936
  %v359 = vsel %vm358, %v350, 1.0
  %v360 = vsel %vm358, %v351, 1.0
  %v361 = vsel %vm358, %v352, 1.0
  %v362 = vsel %vm358, %v353, 1.0
  %v363 = vsel %vm358, %v354, 1.0
  %v364 = vsel %vm358, %v355, 1.0
  %v365 = vsel %vm358, %v356, 1.0
  %v366 = vsel %vm358, %v357, 1.0
  %vm367 = vcmask 48128
  %368 = vst.msk [vmem:[%s2] sm:$0xff] %vm367, %v359
  %369 = vst.msk [vmem:[%s2 + $0x8] sm:$0xff] %vm367, %v360
  %370 = vst.msk [vmem:[%s2 + $0x10] sm:$0xff] %vm367, %v361
  %371 = vst.msk [vmem:[%s2 + $0x18] sm:$0xff] %vm367, %v362
  %372 = vst.msk [vmem:[%s2 + $0x20] sm:$0xff] %vm367, %v363
  %373 = vst.msk [vmem:[%s2 + $0x28] sm:$0xff] %vm367, %v364
  %374 = vst.msk [vmem:[%s2 + $0x30] sm:$0xff] %vm367, %v365
  %375 = vst.msk [vmem:[%s2 + $0x38] sm:$0xff] %vm367, %v366
  %v376 = vmul.f32 %v309, 25.0
  %v377 = vmul.f32 %v310, 25.0
  %v378 = vmul.f32 %v311, 25.0
  %v379 = vmul.f32 %v312, 25.0
  %v380 = vmul.f32 %v313, 25.0
  %v381 = vmul.f32 %v314, 25.0
  %v382 = vmul.f32 %v315, 25.0
  %v383 = vmul.f32 %v316, 25.0
  %v384 = vmul.f32 %v328, -12.5
  %v385 = vmul.f32 %v331, -12.5
  %v386 = vmul.f32 %v334, -12.5
  %v387 = vmul.f32 %v337, -12.5
  %v388 = vmul.f32 %v340, -12.5
  %v389 = vmul.f32 %v343, -12.5
  %v390 = vmul.f32 %v346, -12.5
  %v391 = vmul.f32 %v349, -12.5
  %v392 = vsel %vm325, %v376, -12.5
  %v393 = vsel %vm325, %v377, -12.5
  %v394 = vsel %vm325, %v378, -12.5
  %v395 = vsel %vm325, %v379, -12.5
  %v396 = vsel %vm325, %v380, -12.5
  %v397 = vsel %vm325, %v381, -12.5
  %v398 = vsel %vm325, %v382, -12.5
  %v399 = vsel %vm325, %v383, -12.5
  %v400 = vsel %vm358, %v392, %v384
  %v401 = vsel %vm358, %v393, %v385
  %v402 = vsel %vm358, %v394, %v386
  %v403 = vsel %vm358, %v395, %v387
  %v404 = vsel %vm358, %v396, %v388
  %v405 = vsel %vm358, %v397, %v389
  %v406 = vsel %vm358, %v398, %v390
  %v407 = vsel %vm358, %v399, %v391
  %408 = vst.msk [vmem:[%s3] sm:$0xff] %vm367, %v400
  %409 = vst.msk [vmem:[%s3 + $0x8] sm:$0xff] %vm367, %v401
  %410 = vst.msk [vmem:[%s3 + $0x10] sm:$0xff] %vm367, %v402
  %411 = vst.msk [vmem:[%s3 + $0x18] sm:$0xff] %vm367, %v403
  %412 = vst.msk [vmem:[%s3 + $0x20] sm:$0xff] %vm367, %v404
  %413 = vst.msk [vmem:[%s3 + $0x28] sm:$0xff] %vm367, %v405
  %414 = vst.msk [vmem:[%s3 + $0x30] sm:$0xff] %vm367, %v406
  %415 = vst.msk [vmem:[%s3 + $0x38] sm:$0xff] %vm367, %v407
  // Predicated region
  $region10: #{tpu_custom_call.1} parent=0 // pred_check
    _
  $region11: #{tpu_custom_call.1} parent=0 // pred_check_branch
    %417 = sbr.rel (0) target = $region13
  $region12: #{tpu_custom_call.1} parent=0 // pred_region
    _
  $region13: #{tpu_custom_call.1} parent=0 // pred_fallthru
    _
  // Predicated region
  $region14: #{tpu_custom_call.1} parent=0 // pred_check
    _
  $region15: #{tpu_custom_call.1} parent=0 // pred_check_branch
    %419 = sbr.rel (0) target = $region17
  $region16: #{tpu_custom_call.1} parent=0 // pred_region
    _
  $region17: #{tpu_custom_call.1} parent=0 // pred_fallthru
    _
  // Predicated region
  $region18: #{tpu_custom_call.1} parent=0 // pred_check
    _
  $region19: #{tpu_custom_call.1} parent=0 // pred_check_branch
    %421 = sbr.rel (0) target = $region21
  $region20: #{tpu_custom_call.1} parent=0 // pred_region
    _
  $region21: #{tpu_custom_call.1} parent=0 // pred_fallthru
    _
  // Predicated region
  $region22: #{tpu_custom_call.1} parent=0 // pred_check
    _
  $region23: #{tpu_custom_call.1} parent=0 // pred_check_branch
    %423 = sbr.rel (0) target = $region25
  $region24: #{tpu_custom_call.1} parent=0 // pred_region
    _
  $region25: #{tpu_custom_call.1} parent=0 // pred_fallthru
    _

</llo_original>
